<compile_context>
chip_gen: v5e
topology: v5e:2x2
jax: 0.10.0
libtpu: 0.0.40
codegen_flags: <defaults>
</compile_context>

<pallas_src>
import math

import jax
import jax.numpy as jnp
from jax.experimental import pallas as pl
from jax.experimental.pallas import tpu as pltpu


def _round_up(x, m):
    return (x + m - 1) // m * m


def _vmem_capacity_bytes():
    """Physical VMEM per TensorCore; conservative 64 MiB (v7x) fallback."""
    try:
        info = pltpu.get_tpu_info()
        for name in ("vmem_capacity_bytes", "vmem_bytes", "vmem_size_bytes"):
            cap = getattr(info, name, None)
            if cap:
                return int(cap)
    except Exception:
        pass
    return 64 * 1024 * 1024


def sage_gcn_kernel(src_ref, nei_ref, w_cat_ref, out_ref):
    # Neighbor aggregation: sum over K accumulated in f32, without materializing
    # an f32 copy of the whole [TILE_N, K, D] tile.  (The 1/K mean factor is
    # folded into the W_aggr half of w_cat by the wrapper.)
    nei = nei_ref[...]
    if nei.dtype == jnp.float32:
        nei_sum = jnp.sum(nei, axis=1)                                # [TILE_N, D]
    else:
        nei_sum = jnp.sum(nei, axis=1, dtype=jnp.float32)

    # Fused matmul: [src | nei_sum] @ [W_self ; W_aggr/K], f32 MXU accumulation.
    feats = jnp.concatenate(
        [src_ref[...], nei_sum.astype(src_ref.dtype)], axis=-1)      # [TILE_N, 2D]
    hidden = jnp.dot(feats, w_cat_ref[...],
                     preferred_element_type=jnp.float32)             # [TILE_N, H]

    # aggr_hidden == 'sum' is already inside the single dot; apply ReLU.
    out_ref[...] = jnp.maximum(hidden, 0.0).astype(out_ref.dtype)


def sage_gcn_forward(src_features, neighbor_features, w_self, w_aggr,
                     *, compute_dtype=None, tile_n_cap=1024):
    """src_features: [N, D], neighbor_features: [N, K, D],
    w_self: [D, H], w_aggr: [D, H]  ->  [N, H] (mean-aggregate, sum, relu)."""
    n, d = src_features.shape
    _, k, _ = neighbor_features.shape
    h = w_self.shape[1]

    out_dtype = src_features.dtype
    compute_dtype = jnp.dtype(compute_dtype if compute_dtype is not None
                              else src_features.dtype)

    # Fused weight [W_self ; W_aggr/K] along the contraction dim (tiny copy;
    # the 1/K factor is applied once in f32 before any narrow cast).
    w_cat = jnp.concatenate(
        [w_self.astype(jnp.float32),
         w_aggr.astype(jnp.float32) * (1.0 / k)],
        axis=0).astype(compute_dtype)                                 # [2D, H]

    # Dominant [N, K, D] neighbor stream passed through with NO pad/transpose
    # copy; cast only if a narrower compute dtype was requested.
    src_c = (src_features if src_features.dtype == compute_dtype
             else src_features.astype(compute_dtype))
    nei_c = (neighbor_features if neighbor_features.dtype == compute_dtype
             else neighbor_features.astype(compute_dtype))

    itm = compute_dtype.itemsize
    out_itm = jnp.dtype(out_dtype).itemsize

    # ---- Generation-aware row-tile sizing --------------------------------
    vmem_limit = (_vmem_capacity_bytes() * 3) // 4   # ~48 MiB v7x, ~96 MiB v5e/v6e
    weight_bytes = 2 * (2 * d) * h * itm             # resident weight (double-buffered)
    per_row = (2 * (k * d + d) * itm                 # nei + src blocks (double-buffered)
               + 2 * h * out_itm                     # output block (double-buffered)
               + 4 * d                               # f32 nei_sum temp
               + 2 * d * itm                         # [src | nei_sum] concat temp
               + 4 * h)                              # f32 matmul accumulator
    budget = max((vmem_limit * 3) // 4 - weight_bytes, 0)

    if n <= 8:
        tile_n = n                                   # full-dim block for tiny N
    else:
        tile_n = budget // max(per_row, 1)
        tile_n = min(tile_n, tile_n_cap)
        # Keep >= 4 grid steps: DMA/compute overlap + both v7x TCs busy.
        tile_n = min(tile_n, _round_up(-(-n // 4), 8))
        tile_n = max(8, (tile_n // 8) * 8)
    grid = pl.cdiv(n, tile_n)

    cost = pl.CostEstimate(
        flops=2 * n * (2 * d) * h + n * k * d,       # fused matmul + K-sum adds
        transcendentals=0,
        bytes_accessed=(n * k * d * itm              # neighbor stream (dominant)
                        + n * d * itm                # src features
                        + 2 * d * h * itm            # fused weight
                        + n * h * out_itm),          # output
    )

    return pl.pallas_call(
        sage_gcn_kernel,
        out_shape=jax.ShapeDtypeStruct((n, h), out_dtype),
        grid_spec=pltpu.PrefetchScalarGridSpec(
            num_scalar_prefetch=0,
            grid=(grid,),
            in_specs=[
                pl.BlockSpec((tile_n, d), lambda i: (i, 0)),
                pl.BlockSpec((tile_n, k, d), lambda i: (i, 0, 0)),
                pl.BlockSpec((2 * d, h), lambda i: (0, 0)),   # resident fused weight
            ],
            out_specs=pl.BlockSpec((tile_n, h), lambda i: (i, 0)),
        ),
        compiler_params=pltpu.CompilerParams(
            dimension_semantics=("parallel",),   # v7x: shard row tiles across 2 TCs
            vmem_limit_bytes=vmem_limit,
        ),
        cost_estimate=cost,
    )(src_c, nei_c, w_cat)


def kaiming_uniform(key, shape, dtype=jnp.float32):
    # torch.nn.init.kaiming_uniform_ defaults: a=0 (gain=sqrt(2)), mode='fan_in'.
    # For a 2-D (input_dim, output_dim) Parameter, torch's fan_in = size(1).
    fan_in = shape[1]
    bound = math.sqrt(2.0) * math.sqrt(3.0 / fan_in)
    return jax.random.uniform(key, shape, dtype, minval=-bound, maxval=bound)


if __name__ == "__main__":
    # Small deterministic example: N_src=16 nodes, K=8 neighbors each,
    # input_dim=32, hidden_dim=32.
    N, K, D, H = 16, 8, 32, 32

    key = jax.random.PRNGKey(0)
    k_src, k_nei, k_wself, k_waggr = jax.random.split(key, 4)

    src_node_features = jax.random.normal(k_src, (N, D), jnp.float32)
    neighbor_node_features = jax.random.normal(k_nei, (N, K, D), jnp.float32)

    w_self = kaiming_uniform(k_wself, (D, H))   # SageGCN.weight
    w_aggr = kaiming_uniform(k_waggr, (D, H))   # NeihborAggregator.weight (no bias)

    # Plain-JAX reference (mean-aggregate, sum, relu).
    ref = jnp.maximum(
        src_node_features @ w_self + neighbor_node_features.mean(axis=1) @ w_aggr,
        0.0,
    )

    # f32 path (exact check).
    out = jax.block_until_ready(
        sage_gcn_forward(src_node_features, neighbor_node_features, w_self, w_aggr))
    assert out.shape == (N, H)
    assert jnp.allclose(out, ref, atol=1e-5, rtol=1e-5)

    # bf16 operand path (halves HBM bytes of the dominant neighbor stream;
    # f32 K-sum accumulation and f32 MXU accumulator).
    out_bf16 = jax.block_until_ready(
        sage_gcn_forward(src_node_features, neighbor_node_features, w_self, w_aggr,
                         compute_dtype=jnp.bfloat16))
    assert out_bf16.shape == (N, H)
    assert jnp.allclose(out_bf16.astype(jnp.float32), ref, atol=5e-2, rtol=5e-2)

    print("KERNEL_OK")
</pallas_src>

<mosaic_0001>
module attributes {stable_mosaic.version = 11 : i64} {
  func.func @sage_gcn_kernel(%arg0: i32, %arg1: memref<8x32xf32, #tpu.memory_space<vmem>>, %arg2: memref<8x8x32xf32, #tpu.memory_space<vmem>>, %arg3: memref<64x32xf32, #tpu.memory_space<vmem>>, %arg4: memref<8x32xf32, #tpu.memory_space<vmem>>) attributes {dimension_semantics = [#tpu.dimension_semantics<parallel>], iteration_bounds = array<i64: 2>, scalar_prefetch = 0 : i64, scratch_operands = 0 : i64, tpu.core_type = #tpu.core_type<tc>, window_params = [{transform_indices = @transform_0, window_bounds = array<i64: 8, 32>}, {transform_indices = @transform_1, window_bounds = array<i64: 8, 8, 32>}, {pipeline_mode = #tpu.pipeline_mode<synchronous>, transform_indices = @transform_2, window_bounds = array<i64: 64, 32>}, {transform_indices = @transform_3, window_bounds = array<i64: 8, 32>}]} {
    %c0 = arith.constant 0 : index
    %c0_0 = arith.constant 0 : index
    %c0_1 = arith.constant 0 : index
    %0 = vector.load %arg2[%c0, %c0_0, %c0_1] : memref<8x8x32xf32, #tpu.memory_space<vmem>>, vector<8x8x32xf32>
    %cst = arith.constant dense<0.000000e+00> : vector<8x32xf32>
    %1 = vector.multi_reduction <add>, %0, %cst [1] : vector<8x8x32xf32> to vector<8x32xf32>
    %c0_2 = arith.constant 0 : index
    %c0_3 = arith.constant 0 : index
    %2 = vector.load %arg1[%c0_2, %c0_3] : memref<8x32xf32, #tpu.memory_space<vmem>>, vector<8x32xf32>
    %3 = tpu.concatenate %2, %1 in 1 : vector<8x32xf32>, vector<8x32xf32> -> vector<8x64xf32>
    %c0_4 = arith.constant 0 : index
    %c0_5 = arith.constant 0 : index
    %4 = vector.load %arg3[%c0_4, %c0_5] : memref<64x32xf32, #tpu.memory_space<vmem>>, vector<64x32xf32>
    %cst_6 = arith.constant dense<0.000000e+00> : vector<8x32xf32>
    %5 = tpu.matmul %3, %4, %cst_6 {dimension_numbers = #tpu.dot_dimension_numbers<[1], [0], [0], [1], [0, 0, 1, 1], [], []>} : vector<8x64xf32>, vector<64x32xf32>, vector<8x32xf32> -> vector<8x32xf32>
    %cst_7 = arith.constant 0.000000e+00 : f32
    %6 = vector.broadcast %cst_7 : f32 to vector<8x32xf32>
    %7 = arith.maximumf %5, %6 : vector<8x32xf32>
    %c0_8 = arith.constant 0 : index
    %c0_9 = arith.constant 0 : index
    %8 = vector.load %arg4[%c0_8, %c0_9] : memref<8x32xf32, #tpu.memory_space<vmem>>, vector<8x32xf32>
    tpu.vector_store %arg4[%c0_8, %c0_9], %7 {strides = array<i32>} : memref<8x32xf32, #tpu.memory_space<vmem>>, vector<8x32xf32>,
    return
  }
  func.func @transform_0(%arg0: i32) -> (i32, i32) {
    %c0_i32 = arith.constant 0 : i32
    %c0_i32_0 = arith.constant 0 : i32
    return %arg0, %c0_i32 : i32, i32
  }
  func.func @transform_1(%arg0: i32) -> (i32, i32, i32) {
    %c0_i32 = arith.constant 0 : i32
    %c0_i32_0 = arith.constant 0 : i32
    %c0_i32_1 = arith.constant 0 : i32
    return %arg0, %c0_i32, %c0_i32_0 : i32, i32, i32
  }
  func.func @transform_2(%arg0: i32) -> (i32, i32) {
    %c0_i32 = arith.constant 0 : i32
    %c0_i32_0 = arith.constant 0 : i32
    %c0_i32_1 = arith.constant 0 : i32
    return %c0_i32, %c0_i32_0 : i32, i32
  }
  func.func @transform_3(%arg0: i32) -> (i32, i32) {
    %c0_i32 = arith.constant 0 : i32
    %c0_i32_0 = arith.constant 0 : i32
    return %arg0, %c0_i32 : i32, i32
  }
}

</mosaic_0001>

<llo_original>
// kernel: tpu_custom_call.1
$region0: #{tpu_custom_call.1}
  #allocation0 [shape = 'u32[]', space=smem, size = 0x4, offset = 0x4, fixed_abs, tag = 'smem constant byte address 0x4 - core index']
  #allocation1 [shape = 'u32[72,128]{1,0:T(1,128)}', space=vmem, size = 0x9000, scoped, tag = 'internal scratch']
  %s0 = inlined_call_operand.vmem [shape: f32[16,32], index: 0, kind: input, shape index: {}]
  %s1 = inlined_call_operand.hbm [shape: f32[16,8,32], index: 1, kind: input, shape index: {}]
  %s2 = inlined_call_operand.vmem [shape: f32[64,32], index: 2, kind: input, shape index: {}]
  %s3 = inlined_call_operand.hbm [shape: f32[16,32], index: 3, kind: output, shape index: {}]
  %s4 = sld [smem:[#allocation0]]
  $region49: #{tpu_custom_call.1} parent=0
    _
  %s6 = ssub.s32 1, %s4
  %s7 = scalar_select 0, %s6, %s4
  $region1: #{tpu_custom_call.1} parent=0
    #allocation2 [shape = 'u8[65536]{0}', space=vmem, size = 0x10000, scoped, tag = 'input window, operand 1']
    #allocation3 [shape = 's32[2]{0}', space=sflag, size = 0x8, scoped, tag = 'scoped memory for tpu_custom_call.1']
    #allocation4 [shape = 's32[2]{0}', space=sflag, size = 0x8, scoped, tag = 'scoped memory for tpu_custom_call.1']
    #allocation5 [shape = 'u8[8192]{0}', space=vmem, size = 0x2000, scoped, tag = 'output window, operand 0']
    %8 = vsyncpa [#allocation3], 0
    %s9 = scalar_lea.sflag [#allocation3], 1
    %10 = vsyncpa %s9, 0
    %11 = vsyncpa [#allocation4], 0
    %s12 = scalar_lea.sflag [#allocation4], 1
    %13 = vsyncpa %s12, 0
    loop: start=0, step=1, limit=4
    $region2: #{tpu_custom_call.1} parent=1 // loop_pre_header
      _
    $region3: #{tpu_custom_call.1} parent=1 // loop_header
      %s15 = sphi 0, %s19
      %p16 = scmp.ge.s32.totalorder %s15, 4
      %s25 = sphi 0, %s27
      %s28 = sphi 0, %s25
      %s29 = sphi 0, %s28
      %s45 = sphi 0, %s29
      %s51 = sphi 0, %s53
      %s54 = sphi 0, %s51
      %s55 = sphi 0, %s54
      %s71 = sphi 0, %s55
      %s75 = sphi 0, %s75
      %s77 = sphi 0, %s75
      %s78 = sphi 0, %s77
      %s92 = sphi 0, %s78
      %s98 = sphi 0, %s100
      %s101 = sphi 0, %s98
      %s102 = sphi 0, %s101
      %s118 = sphi 0, %s102
    $region4: #{tpu_custom_call.1} parent=1 // loop_header_branch
      %18 = sbr.rel (%p16) target = $region8
    $region5: #{tpu_custom_call.1} parent=1 // loop_body
      %s20 = ssub.s32 %s15, 1
      %s21 = ssub.s32 %s15, 2
      %s22 = sadd.s32 %s15, 1
      %s23 = ssub.s32 %s15, %s22
      %p24 = scmp.eq.s32.totalorder %s23, 0
      %s26 = sadd.s32 %s25, 1
      %s27 = scalar_select %p24, %s25, %s26
      %p30 = pneg %p24
      %p31 = scmp.eq.s32.totalorder %s15, 1
      %p32 = por %p30, %p31
      %p33 = scmp.ne.s32.totalorder %s25, %s28
      %p34 = scmp.eq.s32.totalorder %s15, 0
      %p35 = por %p33, %p34
      %p36 = scmp.ne.s32.totalorder %s25, %s28
      %p37 = scmp.eq.s32.totalorder %s20, 1
      %p38 = por %p36, %p37
      %p39 = scmp.ne.s32.totalorder %s28, %s29
      %p40 = scmp.eq.s32.totalorder %s20, 0
      %p41 = por %p39, %p40
      %p42 = scmp.ne.s32.totalorder %s28, %s29
      %p43 = scmp.eq.s32.totalorder %s21, 1
      %p44 = por %p42, %p43
      %p46 = scmp.ne.s32.totalorder %s29, %s45
      %p47 = scmp.eq.s32.totalorder %s21, 0
      %p48 = por %p46, %p47
      %s49 = ssub.s32 %s15, %s22
      %p50 = scmp.eq.s32.totalorder %s49, 0
      %s52 = sadd.s32 %s51, 1
      %s53 = scalar_select %p50, %s51, %s52
      %p56 = pneg %p50
      %p57 = scmp.eq.s32.totalorder %s15, 1
      %p58 = por %p56, %p57
      %p59 = scmp.ne.s32.totalorder %s51, %s54
      %p60 = scmp.eq.s32.totalorder %s15, 0
      %p61 = por %p59, %p60
      %p62 = scmp.ne.s32.totalorder %s51, %s54
      %p63 = scmp.eq.s32.totalorder %s20, 1
      %p64 = por %p62, %p63
      %p65 = scmp.ne.s32.totalorder %s54, %s55
      %p66 = scmp.eq.s32.totalorder %s20, 0
      %p67 = por %p65, %p66
      %p68 = scmp.ne.s32.totalorder %s54, %s55
      %p69 = scmp.eq.s32.totalorder %s21, 1
      %p70 = por %p68, %p69
      %p72 = scmp.ne.s32.totalorder %s55, %s71
      %p73 = scmp.eq.s32.totalorder %s21, 0
      %p74 = por %p72, %p73
      %s76 = sadd.s32 %s75, 1
      %p79 = scmp.eq.s32.totalorder %s15, 1
      %p80 = scmp.ne.s32.totalorder %s75, %s77
      %p81 = scmp.eq.s32.totalorder %s15, 0
      %p82 = por %p80, %p81
      %p83 = scmp.ne.s32.totalorder %s75, %s77
      %p84 = scmp.eq.s32.totalorder %s20, 1
      %p85 = por %p83, %p84
      %p86 = scmp.ne.s32.totalorder %s77, %s78
      %p87 = scmp.eq.s32.totalorder %s20, 0
      %p88 = por %p86, %p87
      %p89 = scmp.ne.s32.totalorder %s77, %s78
      %p90 = scmp.eq.s32.totalorder %s21, 1
      %p91 = por %p89, %p90
      %p93 = scmp.ne.s32.totalorder %s78, %s92
      %p94 = scmp.eq.s32.totalorder %s21, 0
      %p95 = por %p93, %p94
      %s96 = ssub.s32 %s15, %s22
      %p97 = scmp.eq.s32.totalorder %s96, 0
      %s99 = sadd.s32 %s98, 1
      %s100 = scalar_select %p97, %s98, %s99
      %p103 = pneg %p97
      %p104 = scmp.eq.s32.totalorder %s15, 1
      %p105 = por %p103, %p104
      %p106 = scmp.ne.s32.totalorder %s98, %s101
      %p107 = scmp.eq.s32.totalorder %s15, 0
      %p108 = por %p106, %p107
      %p109 = scmp.ne.s32.totalorder %s98, %s101
      %p110 = scmp.eq.s32.totalorder %s20, 1
      %p111 = por %p109, %p110
      %p112 = scmp.ne.s32.totalorder %s101, %s102
      %p113 = scmp.eq.s32.totalorder %s20, 0
      %p114 = por %p112, %p113
      %p115 = scmp.ne.s32.totalorder %s101, %s102
      %p116 = scmp.eq.s32.totalorder %s21, 1
      %p117 = por %p115, %p116
      %p119 = scmp.ne.s32.totalorder %s102, %s118
      %p120 = scmp.eq.s32.totalorder %s21, 0
      %p121 = por %p119, %p120
      %p122 = scmp.le.s32.totalorder 1, %s15
      %p123 = scmp.lt.s32.totalorder %s15, 3
      %p124 = pnand %p122, %p123
      %p125 = pneg %p124
      // Predicated region
      $region9: #{tpu_custom_call.1} parent=5 // pred_check
        _
      $region10: #{tpu_custom_call.1} parent=5 // pred_check_branch
        %127 = sbr.rel (%p124) target = $region12
      $region11: #{tpu_custom_call.1} parent=5 // pred_region
        %s128 = ssub.s32 %s15, 1
        // Predicated region
        $region13: #{tpu_custom_call.1} parent=11 // pred_check
          %p129 = pneg %p88
        $region14: #{tpu_custom_call.1} parent=11 // pred_check_branch
          %131 = sbr.rel (%p129) target = $region16
        $region15: #{tpu_custom_call.1} parent=11 // pred_region
          _
        $region16: #{tpu_custom_call.1} parent=11 // pred_fallthru
          _
      $region12: #{tpu_custom_call.1} parent=5 // pred_fallthru
        _
      %p132 = scmp.lt.s32.totalorder %s15, 2
      // Predicated region
      $region17: #{tpu_custom_call.1} parent=5 // pred_check
        %p133 = pneg %p132
      $region18: #{tpu_custom_call.1} parent=5 // pred_check_branch
        %135 = sbr.rel (%p133) target = $region20
      $region19: #{tpu_custom_call.1} parent=5 // pred_region
        // Predicated region
        $region21: #{tpu_custom_call.1} parent=19 // pred_check
          %p136 = pneg %p35
        $region22: #{tpu_custom_call.1} parent=19 // pred_check_branch
          %138 = sbr.rel (%p136) target = $region24
        $region23: #{tpu_custom_call.1} parent=19 // pred_region
          %p139 = scmp.lt.s32.totalorder %s15, 1
          %s140 = scalar_select %p139, %s15, 1
          %s141 = smul.addr %s140, 8
          %s142 = scalar_lea.vmem %s0, %s141
        $region24: #{tpu_custom_call.1} parent=19 // pred_fallthru
          _
        // Predicated region
        $region25: #{tpu_custom_call.1} parent=19 // pred_check
          %p143 = pneg %p61
        $region26: #{tpu_custom_call.1} parent=19 // pred_check_branch
          %145 = sbr.rel (%p143) target = $region28
        $region27: #{tpu_custom_call.1} parent=19 // pred_region
          %s146 = sand.u32 %s51, 1
          %s147 = scalar_lea.sflag [#allocation3], %s146
          %s148 = sand.u32 %s51, 1
          %s149 = smul.addr %s148, 64
          %s150 = scalar_lea.vmem [#allocation2], %s149
          %s151 = smul.u32 8, %s15
          %153 = vsyncadd %s147, 0
          %s154 = smul.addr %s151, 8
          %s155 = scalar_lea.hbm %s1, %s154
          %s156 = sshll.u32 %s155, 4
          %s157 = int_to_ptr.hbm [resolvable:$true] %s156
          %s158 = sshll.u32 %s150, 4
          %s159 = int_to_ptr.vmem [resolvable:$true] %s158
          %164 = dma.hbm_to_vmem [thread:$0]  %s157, 1024, %s159, %s147, 128, 128, 8
        $region28: #{tpu_custom_call.1} parent=19 // pred_fallthru
          _
      $region20: #{tpu_custom_call.1} parent=5 // pred_fallthru
        _
      %p165 = scmp.le.s32.totalorder 1, %s15
      %p166 = scmp.lt.s32.totalorder %s15, 3
      %p167 = pnand %p165, %p166
      %p168 = pneg %p167
      // Predicated region
      $region29: #{tpu_custom_call.1} parent=5 // pred_check
        _
      $region30: #{tpu_custom_call.1} parent=5 // pred_check_branch
        %170 = sbr.rel (%p167) target = $region32
      $region31: #{tpu_custom_call.1} parent=5 // pred_region
        %s171 = ssub.s32 %s15, 1
        %s172 = sand.u32 %s54, 1
        %s173 = scalar_lea.sflag [#allocation3], %s172
        %s174 = sand.u32 %s54, 1
        %s175 = smul.addr %s174, 64
        %s176 = scalar_lea.vmem [#allocation2], %s175
        // Predicated region
        $region33: #{tpu_custom_call.1} parent=31 // pred_check
          %p177 = pneg %p67
        $region34: #{tpu_custom_call.1} parent=31 // pred_check_branch
          %179 = sbr.rel (%p177) target = $region36
        $region35: #{tpu_custom_call.1} parent=31 // pred_region
          %181 = dma.done %s173, 1024
        $region36: #{tpu_custom_call.1} parent=31 // pred_fallthru
          _
        %p182 = scmp.lt.s32.totalorder %s20, 1
        %s183 = scalar_select %p182, %s20, 1
        %s184 = smul.addr %s183, 8
        %s185 = scalar_lea.vmem %s0, %s184
        %p186 = pneg %p41
        %p187 = pneg %p38
        %s188 = sand.u32 %s54, 1
        %s189 = scalar_lea.sflag [#allocation3], %s188
        %s190 = sand.u32 %s54, 1
        %s191 = smul.addr %s190, 64
        %s192 = scalar_lea.vmem [#allocation2], %s191
        %p193 = pneg %p67
        %p194 = pneg %p64
        %p195 = pneg %p88
        %p196 = pneg %p85
        %p197 = pneg %p114
        %p198 = pneg %p111
        %s199 = sand.u32 %s101, 1
        %s200 = scalar_lea.sflag [#allocation4], %s199
        %s201 = sand.u32 %s101, 1
        %s202 = smul.addr %s201, 8
        %s203 = scalar_lea.vmem [#allocation5], %s202
        %p204 = scmp.lt.s32.totalorder %s20, 1
        %s205 = scalar_select %p204, %s20, 1
        %s206 = smul.addr %s205, 8
        %s207 = scalar_lea.vmem %s0, %s206
        %s208 = smul.u32 8, %s20
        %v209 = vld [vmem:[%s176] sm:$0xff]
        %v210 = vld [vmem:[%s176 + $0x8] sm:$0xff]
        %v211 = vld [vmem:[%s176 + $0x10] sm:$0xff]
        %v212 = vld [vmem:[%s176 + $0x18] sm:$0xff]
        %v213 = vld [vmem:[%s176 + $0x20] sm:$0xff]
        %v214 = vld [vmem:[%s176 + $0x28] sm:$0xff]
        %v215 = vld [vmem:[%s176 + $0x30] sm:$0xff]
        %v216 = vld [vmem:[%s176 + $0x38] sm:$0xff]
        %vm217 = vcmask 261120
        %v218 = vsel %vm217, %v209, 0.0
        %v219 = vrot.slane %v218, 4
        %v220 = vadd.f32 %v218, %v219
        %v221 = vrot.slane %v220, 2
        %v222 = vadd.f32 %v220, %v221
        %v223 = vrot.slane %v222, 1
        %v224 = vadd.f32 %v222, %v223
        %v225 = vsel %vm217, %v210, 0.0
        %v226 = vrot.slane %v225, 4
        %v227 = vadd.f32 %v225, %v226
        %v228 = vrot.slane %v227, 2
        %v229 = vadd.f32 %v227, %v228
        %v230 = vrot.slane %v229, 1
        %v231 = vadd.f32 %v229, %v230
        %v232 = vsel %vm217, %v211, 0.0
        %v233 = vrot.slane %v232, 4
        %v234 = vadd.f32 %v232, %v233
        %v235 = vrot.slane %v234, 2
        %v236 = vadd.f32 %v234, %v235
        %v237 = vrot.slane %v236, 1
        %v238 = vadd.f32 %v236, %v237
        %v239 = vsel %vm217, %v212, 0.0
        %v240 = vrot.slane %v239, 4
        %v241 = vadd.f32 %v239, %v240
        %v242 = vrot.slane %v241, 2
        %v243 = vadd.f32 %v241, %v242
        %v244 = vrot.slane %v243, 1
        %v245 = vadd.f32 %v243, %v244
        %v246 = vsel %vm217, %v213, 0.0
        %v247 = vrot.slane %v246, 4
        %v248 = vadd.f32 %v246, %v247
        %v249 = vrot.slane %v248, 2
        %v250 = vadd.f32 %v248, %v249
        %v251 = vrot.slane %v250, 1
        %v252 = vadd.f32 %v250, %v251
        %v253 = vsel %vm217, %v214, 0.0
        %v254 = vrot.slane %v253, 4
        %v255 = vadd.f32 %v253, %v254
        %v256 = vrot.slane %v255, 2
        %v257 = vadd.f32 %v255, %v256
        %v258 = vrot.slane %v257, 1
        %v259 = vadd.f32 %v257, %v258
        %v260 = vsel %vm217, %v215, 0.0
        %v261 = vrot.slane %v260, 4
        %v262 = vadd.f32 %v260, %v261
        %v263 = vrot.slane %v262, 2
        %v264 = vadd.f32 %v262, %v263
        %v265 = vrot.slane %v264, 1
        %v266 = vadd.f32 %v264, %v265
        %v267 = vsel %vm217, %v216, 0.0
        %v268 = vrot.slane %v267, 4
        %v269 = vadd.f32 %v267, %v268
        %v270 = vrot.slane %v269, 2
        %v271 = vadd.f32 %v269, %v270
        %v272 = vrot.slane %v271, 1
        %v273 = vadd.f32 %v271, %v272
        %v274 = vld [vmem:[%s207] sm:$0xff]
        %vm283 = vcmask 1041409
        %v284 = vsel %vm283, %v231, %v224
        %vm285 = vcmask 1042434
        %v286 = vsel %vm285, %v238, %v284
        %vm287 = vcmask 1043459
        %v288 = vsel %vm287, %v245, %v286
        %vm289 = vcmask 1044484
        %v290 = vsel %vm289, %v252, %v288
        %vm291 = vcmask 1045509
        %v292 = vsel %vm291, %v259, %v290
        %vm293 = vcmask 1046534
        %v294 = vsel %vm293, %v266, %v292
        %vm295 = vcmask 1047559
        %v296 = vsel %vm295, %v273, %v294
        %297 = vrot.lane.b32.xlu0 %v296, 32
        %v298 = vpop.permute.xlu0 %297
        %v300 = vsel %vm217, %v274, %v298
        %v301 = vld [vmem:[%s2] sm:$0xff]
        %v302 = vld [vmem:[%s2 + $0x8] sm:$0xff]
        %v303 = vld [vmem:[%s2 + $0x10] sm:$0xff]
        %v304 = vld [vmem:[%s2 + $0x18] sm:$0xff]
        %v305 = vld [vmem:[%s2 + $0x20] sm:$0xff]
        %v306 = vld [vmem:[%s2 + $0x28] sm:$0xff]
        %v307 = vld [vmem:[%s2 + $0x30] sm:$0xff]
        %v308 = vld [vmem:[%s2 + $0x38] sm:$0xff]
        %vm309 = vcmask 523264
        %v311 = vsel %vm309, %v300, 0
        %313 = vmatpush.msra.mxu0 0.0
        %314 = vmatpush.msra.mxu0 0.0
        %315 = vmatpush.msra.mxu0 0.0
        %316 = vmatpush.msra.mxu0 0.0
        %317 = vmatpush.msra.mxu0 0.0
        %318 = vmatpush.msra.mxu0 0.0
        %319 = vmatpush.msra.mxu0 0.0
        %320 = vmatpush.msra.mxu0 0.0
        %321 = vmatpush.msra.mxu0 %v308
        %322 = vmatpush.msra.mxu0 %v307
        %323 = vmatpush.msra.mxu0 %v306
        %324 = vmatpush.msra.mxu0 %v305
        %325 = vmatpush.msra.mxu0 %v304
        %326 = vmatpush.msra.mxu0 %v303
        %327 = vmatpush.msra.mxu0 %v302
        %328 = vmatpush.msra.mxu0 %v301
        %329 = vmatmul.f32.gmra.mxu0 %v311
        %v330 = vpop.f32.mrf.mxu0
        %v331 = vadd.f32 0.0, %v330
        %332 = vdwg.mxu0
        %v333 = vmax.f32 %v331, 0.0
        %334 = vst.msk [vmem:[%s203] sm:$0xff] %vm217, %v333
        %s335 = sand.u32 %s101, 1
        %s336 = scalar_lea.sflag [#allocation4], %s335
        %s337 = sand.u32 %s101, 1
        %s338 = smul.addr %s337, 8
        %s339 = scalar_lea.vmem [#allocation5], %s338
        // Predicated region
        $region37: #{tpu_custom_call.1} parent=31 // pred_check
          %p340 = pneg %p111
        $region38: #{tpu_custom_call.1} parent=31 // pred_check_branch
          %342 = sbr.rel (%p340) target = $region40
        $region39: #{tpu_custom_call.1} parent=31 // pred_region
          %344 = vsyncadd %s336, 0
          %s345 = smul.addr %s20, 8
          %s346 = scalar_lea.hbm %s3, %s345
          %s348 = sshll.u32 %s339, 4
          %s349 = int_to_ptr.vmem [resolvable:$true] %s348
          %s350 = sshll.u32 %s346, 4
          %s351 = int_to_ptr.hbm [resolvable:$true] %s350
          %353 = dma.vmem_to_hbm [thread:$0]  %s349, 128, %s351, %s336
        $region40: #{tpu_custom_call.1} parent=31 // pred_fallthru
          _
      $region32: #{tpu_custom_call.1} parent=5 // pred_fallthru
        _
      %p354 = scmp.le.s32.totalorder 2, %s15
      // Predicated region
      $region41: #{tpu_custom_call.1} parent=5 // pred_check
        %p355 = pneg %p354
      $region42: #{tpu_custom_call.1} parent=5 // pred_check_branch
        %357 = sbr.rel (%p355) target = $region44
      $region43: #{tpu_custom_call.1} parent=5 // pred_region
        %s358 = ssub.s32 %s15, 2
        // Predicated region
        $region45: #{tpu_custom_call.1} parent=43 // pred_check
          %p359 = pneg %p117
        $region46: #{tpu_custom_call.1} parent=43 // pred_check_branch
          %361 = sbr.rel (%p359) target = $region48
        $region47: #{tpu_custom_call.1} parent=43 // pred_region
          %s362 = sand.u32 %s102, 1
          %s363 = scalar_lea.sflag [#allocation4], %s362
          %s364 = sand.u32 %s102, 1
          %s365 = smul.addr %s364, 8
          %s366 = scalar_lea.vmem [#allocation5], %s365
          %368 = dma.done %s363, 128
        $region48: #{tpu_custom_call.1} parent=43 // pred_fallthru
          _
      $region44: #{tpu_custom_call.1} parent=5 // pred_fallthru
        _
    $region6: #{tpu_custom_call.1} parent=1 // loop_footer
      %s19 = sadd.s32 1, %s15
    $region7: #{tpu_custom_call.1} parent=1 // loop_footer_branch
      %14 = sbr.rel target = $region3
    $region8: #{tpu_custom_call.1} parent=1 // loop_exit
      _
    %369 = vsyncpa [#allocation3], 1
    %s370 = scalar_lea.sflag [#allocation3], 1
    %371 = vsyncpa %s370, 1
    %372 = vsyncpa [#allocation4], 1
    %s373 = scalar_lea.sflag [#allocation4], 1
    %374 = vsyncpa %s373, 1

</llo_original>
